<compile_context>
chip_gen: v5e
topology: v5e:2x2
jax: 0.10.0
libtpu: 0.0.40
codegen_flags: <defaults>
</compile_context>

<pallas_src>
import math

import jax
import jax.numpy as jnp
from jax.experimental import pallas as pl
from jax.experimental.pallas import tpu as pltpu


def _copy_kernel(x_ref, o_ref):
    # Identity copy of the current tile — the only "compute" a materialized
    # reshape implies.
    o_ref[...] = x_ref[...]


def _materialized_copy_2d(x2d):
    """Tiled, pipelined identity copy of a (rows, L) lane-dense slab."""
    rows, L = x2d.shape
    itemsize = jnp.dtype(x2d.dtype).itemsize

    # Sublane packing unit: 8 for 32-bit, 16 for bf16, 32 for int8.
    sublane_pack = 8 * max(1, 4 // itemsize)

    # Cap per-tile VMEM at ~4 MiB: with 1 input + 1 output, each
    # double-buffered, that is <= 16 MiB of VMEM — safe on v5e/v6e/v7x.
    max_tile_bytes = 4 * 1024 * 1024
    max_rows = max(sublane_pack, max_tile_bytes // (L * itemsize))

    if rows <= max_rows:
        # Full-dim block (always layout-legal), single step.
        block_rows = rows
        grid = (1,)
    else:
        # Sublane-dense tile; Pallas masks the (at most one) partial edge block.
        block_rows = (max_rows // sublane_pack) * sublane_pack
        grid = (pl.cdiv(rows, block_rows),)

    tile_bytes = block_rows * L * itemsize
    # Explicit VMEM budget: double-buffered in + out, plus slack.
    vmem_limit = min(100 * 1024 * 1024, max(4 * tile_bytes + (2 << 20), 4 << 20))

    return pl.pallas_call(
        _copy_kernel,
        out_shape=jax.ShapeDtypeStruct((rows, L), x2d.dtype),
        grid=grid,
        in_specs=[pl.BlockSpec((block_rows, L), lambda i: (i, 0))],
        out_specs=pl.BlockSpec((block_rows, L), lambda i: (i, 0)),
        input_output_aliases={0: 0},
        compiler_params=pltpu.CompilerParams(
            dimension_semantics=("parallel",),
            vmem_limit_bytes=vmem_limit,
        ),
        cost_estimate=pl.CostEstimate(
            flops=0,
            transcendentals=0,
            bytes_accessed=2 * rows * L * itemsize,
        ),
    )(x2d)


def reshape_forward(x, outer_shape, materialize=False):
    """Equivalent of Reshape(outer_shape)(x) in PyTorch.

    Default (materialize=False): metadata-only reshape — zero data movement,
    exactly what torch .view() is. Set materialize=True to force an explicit
    HBM round-trip through the Pallas copy kernel (e.g. to defragment or to
    benchmark the copy).
    """
    b = x.shape[0]
    total = math.prod(x.shape[1:])
    out_total = math.prod(outer_shape)
    assert total == out_total, (
        f"cannot view {x.shape} as (batch, {outer_shape}): {total} != {out_total}"
    )
    out_shape = (b,) + tuple(outer_shape)

    if not materialize:
        # Hot path: pure view. XLA emits no data movement for this.
        return x.reshape(out_shape)

    n = b * total

    # Choose a lane-dense flat layout (rows, L): L a large multiple of 128,
    # preferring rows >= 8 so sublanes are dense too. Row-major identity copy
    # of the whole buffer is shape-agnostic, so collapsing batch is legal.
    L = 0
    for cand in (2048, 1024, 512, 256, 128):
        if n % cand == 0 and (n // cand) >= 8:
            L = cand
            break
    if L == 0:
        for cand in (2048, 1024, 512, 256, 128):
            if n % cand == 0:
                L = cand
                break

    if L == 0:
        # Awkward size (not a multiple of 128): single full-array block copy
        # (full-dim exception to the (8,128) rule). Small inputs only.
        flat = x.reshape(1, n)
        out = pl.pallas_call(
            _copy_kernel,
            out_shape=jax.ShapeDtypeStruct((1, n), x.dtype),
            grid=(1,),
            in_specs=[pl.BlockSpec((1, n), lambda i: (0, 0))],
            out_specs=pl.BlockSpec((1, n), lambda i: (0, 0)),
            input_output_aliases={0: 0},
        )(flat)
        return out.reshape(out_shape)

    rows = n // L
    out2d = _materialized_copy_2d(x.reshape(rows, L))
    return out2d.reshape(out_shape)


if __name__ == "__main__":
    key = jax.random.PRNGKey(0)
    # Small NCHW input consistent with a conv-stack feature map.
    x = jax.random.normal(key, (2, 4, 16, 16), dtype=jnp.float32)

    # Reshape(outer_shape=(16, 64)): 4*16*16 == 16*64 == 1024
    outer_shape = (16, 64)

    # Fast (default) path: metadata-only view, zero data movement.
    y_view = reshape_forward(x, outer_shape)
    # Materialized path: exercises the Pallas copy kernel once.
    y_mat = reshape_forward(x, outer_shape, materialize=True)
    y_view, y_mat = jax.block_until_ready((y_view, y_mat))

    # Correctness check against the pure-JAX reference (== torch .view()).
    y_ref = x.reshape(x.shape[0], *outer_shape)
    assert y_view.shape == (2, 16, 64), y_view.shape
    assert y_mat.shape == (2, 16, 64), y_mat.shape
    assert y_view.dtype == x.dtype and y_mat.dtype == x.dtype
    assert bool(jnp.array_equal(y_view, y_ref))
    assert bool(jnp.array_equal(y_mat, y_ref))

    print("KERNEL_OK")
</pallas_src>

<mosaic_0001>
module attributes {stable_mosaic.version = 11 : i64} {
  func.func @_copy_kernel(%arg0: i32, %arg1: memref<8x256xf32, #tpu.memory_space<vmem>>, %arg2: memref<8x256xf32, #tpu.memory_space<vmem>>) attributes {dimension_semantics = [#tpu.dimension_semantics<parallel>], iteration_bounds = array<i64: 1>, scalar_prefetch = 0 : i64, scratch_operands = 0 : i64, tpu.core_type = #tpu.core_type<tc>, window_params = [{transform_indices = @transform_0, window_bounds = array<i64: 8, 256>}, {transform_indices = @transform_1, window_bounds = array<i64: 8, 256>}]} {
    %c0 = arith.constant 0 : index
    %c0_0 = arith.constant 0 : index
    %0 = vector.load %arg1[%c0, %c0_0] : memref<8x256xf32, #tpu.memory_space<vmem>>, vector<8x256xf32>
    %c0_1 = arith.constant 0 : index
    %c0_2 = arith.constant 0 : index
    %1 = vector.load %arg2[%c0_1, %c0_2] : memref<8x256xf32, #tpu.memory_space<vmem>>, vector<8x256xf32>
    tpu.vector_store %arg2[%c0_1, %c0_2], %0 {strides = array<i32>} : memref<8x256xf32, #tpu.memory_space<vmem>>, vector<8x256xf32>,
    return
  }
  func.func @transform_0(%arg0: i32) -> (i32, i32) {
    %c0_i32 = arith.constant 0 : i32
    %c0_i32_0 = arith.constant 0 : i32
    return %arg0, %c0_i32 : i32, i32
  }
  func.func @transform_1(%arg0: i32) -> (i32, i32) {
    %c0_i32 = arith.constant 0 : i32
    %c0_i32_0 = arith.constant 0 : i32
    return %arg0, %c0_i32 : i32, i32
  }
}

</mosaic_0001>

<llo_original>
// kernel: tpu_custom_call.1
$region0: #{tpu_custom_call.1}
  #allocation0 [shape = 'u32[]', space=smem, size = 0x4, offset = 0x4, fixed_abs, tag = 'smem constant byte address 0x4 - core index']
  #allocation1 [shape = 'u32[72,128]{1,0:T(1,128)}', space=vmem, size = 0x9000, scoped, tag = 'internal scratch']
  %s0 = inlined_call_operand.hbm [shape: f32[8,256], index: 0, kind: input, shape index: {}, may-alias: {0,1}]
  %s1 = inlined_call_operand.hbm [shape: f32[8,256], index: 1, kind: output, shape index: {}, may-alias: {0,1}]
  %s2 = sld [smem:[#allocation0]]
  $region18: #{tpu_custom_call.1} parent=0
    _
  %s4 = ssub.s32 1, %s2
  %s5 = scalar_select 0, %s4, %s2
  $region1: #{tpu_custom_call.1} parent=0
    #allocation2 [shape = 'u8[8192]{0}', space=vmem, size = 0x2000, scoped, tag = 'input window, operand 0, single buffered']
    #allocation3 [shape = 's32[1]{0}', space=sflag, size = 0x4, scoped, tag = 'scoped memory for tpu_custom_call.1']
    #allocation4 [shape = 's32[1]{0}', space=sflag, size = 0x4, scoped, tag = 'scoped memory for tpu_custom_call.1']
    #allocation5 [shape = 'u8[8192]{0}', space=vmem, size = 0x2000, scoped, tag = 'output window, operand 0, single buffered']
    %6 = vsyncpa [#allocation3], 0
    %7 = vsyncpa [#allocation4], 0
    // Predicated region
    $region2: #{tpu_custom_call.1} parent=1 // pred_check
      _
    $region3: #{tpu_custom_call.1} parent=1 // pred_check_branch
      %9 = sbr.rel (0) target = $region5
    $region4: #{tpu_custom_call.1} parent=1 // pred_region
      %11 = vsyncadd [#allocation3], 0
      %s13 = sshll.u32 %s0, 4
      %s14 = int_to_ptr.hbm [resolvable:$true] %s13
      %s15 = sshll.u32 [#allocation2], 4
      %s16 = int_to_ptr.vmem [resolvable:$true] %s15
      %18 = dma.hbm_to_vmem [thread:$0]  %s14, 256, %s16, [#allocation3]
    $region5: #{tpu_custom_call.1} parent=1 // pred_fallthru
      _
    // Predicated region
    $region6: #{tpu_custom_call.1} parent=1 // pred_check
      _
    $region7: #{tpu_custom_call.1} parent=1 // pred_check_branch
      %20 = sbr.rel (0) target = $region9
    $region8: #{tpu_custom_call.1} parent=1 // pred_region
      %22 = dma.done [#allocation3], 256
    $region9: #{tpu_custom_call.1} parent=1 // pred_fallthru
      _
    %v23 = vld [vmem:[#allocation2] sm:$0xff]
    %v24 = vld [vmem:[#allocation2 + $0x8] sm:$0xff]
    %25 = vst [vmem:[#allocation5] sm:$0xff] %v23
    %26 = vst [vmem:[#allocation5 + $0x8] sm:$0xff] %v24
    // Predicated region
    $region10: #{tpu_custom_call.1} parent=1 // pred_check
      _
    $region11: #{tpu_custom_call.1} parent=1 // pred_check_branch
      %28 = sbr.rel (0) target = $region13
    $region12: #{tpu_custom_call.1} parent=1 // pred_region
      %30 = vsyncadd [#allocation4], 0
      %s32 = sshll.u32 [#allocation5], 4
      %s33 = int_to_ptr.vmem [resolvable:$true] %s32
      %s34 = sshll.u32 %s1, 4
      %s35 = int_to_ptr.hbm [resolvable:$true] %s34
      %37 = dma.vmem_to_hbm [thread:$0]  %s33, 256, %s35, [#allocation4]
    $region13: #{tpu_custom_call.1} parent=1 // pred_fallthru
      _
    // Predicated region
    $region14: #{tpu_custom_call.1} parent=1 // pred_check
      _
    $region15: #{tpu_custom_call.1} parent=1 // pred_check_branch
      %39 = sbr.rel (0) target = $region17
    $region16: #{tpu_custom_call.1} parent=1 // pred_region
      %41 = dma.done [#allocation4], 256
    $region17: #{tpu_custom_call.1} parent=1 // pred_fallthru
      _
    %42 = vsyncpa [#allocation3], 1
    %43 = vsyncpa [#allocation4], 1

</llo_original>
